<compile_context>
chip_gen: v7x
topology: tpu7x:2x2x1
jax: 0.10.0
libtpu: 0.0.40
codegen_flags: <defaults>
</compile_context>

<pallas_src>
import functools

import jax
import jax.numpy as jnp
from jax.experimental import pallas as pl
from jax.experimental.pallas import tpu as pltpu


def _round_up(x, m):
    return ((x + m - 1) // m) * m


# ----------------------------------------------------------------------------
# Kernel: one batch tile -> partial loss sum (scalar) for that tile.
# ----------------------------------------------------------------------------
def _triplet_loss_kernel(anc_ref, pos_ref, neg_ref, out_ref, *,
                         margin, batch, tile_b, num_pos, num_neg, dim):
    i = pl.program_id(0)

    # f32 accumulation regardless of input dtype (v5e has no bf16 VPU/EUP);
    # the kernel is HBM-bound, so on-chip casts are free.  Hoisted out of the
    # per-positive / per-negative loops.
    anc = anc_ref[...].astype(jnp.float32)                       # (TB, D)

    # max_j ||pos_j - anc||^2 per row.  Each positive is a static lane slice
    # of the dense (TB, P*D) block: VPU diff/square + XLU lane reduction.
    max_pos = None
    for j in range(num_pos):
        p = pos_ref[:, j * dim:(j + 1) * dim].astype(jnp.float32)
        d = jnp.sum(jnp.square(p - anc), axis=-1, keepdims=True)  # (TB, 1)
        max_pos = d if max_pos is None else jnp.maximum(max_pos, d)

    # sum_k relu(margin + max_pos - ||neg_k - anc||^2) per row.
    row_sum = jnp.zeros((tile_b, 1), jnp.float32)
    for k in range(num_neg):
        n = neg_ref[:, k * dim:(k + 1) * dim].astype(jnp.float32)
        d = jnp.sum(jnp.square(n - anc), axis=-1, keepdims=True)  # (TB, 1)
        row_sum = row_sum + jnp.maximum(margin + max_pos - d, 0.0)

    # Mask rows past the true batch (the last block may run out of bounds:
    # its contents are unspecified, and this select also squashes NaN/inf).
    row = i * tile_b + jax.lax.broadcasted_iota(jnp.int32, (tile_b, 1), 0)
    row_sum = jnp.where(row < batch, row_sum, 0.0)

    # Per-tile partial sum; final reduction + /batch happens in the wrapper.
    out_ref[...] = jnp.sum(row_sum, keepdims=True).reshape(1, 1, 1)


# ----------------------------------------------------------------------------
# Wrapper: layout plumbing (lane-dense 2-D slabs, batch tiling) + pallas_call.
# ----------------------------------------------------------------------------
def triplet_loss_pallas(anc_global, pos_global, neg_global, margin, *,
                        tile_b=None,
                        vmem_target_bytes=8 * 1024 * 1024,
                        vmem_limit_bytes=48 * 1024 * 1024):
    B, A, D = anc_global.shape
    assert A == 1, "anchor must have a singleton dim 1 (matches torch .repeat)"
    Bp, P, Dp = pos_global.shape
    Bn, N, Dn = neg_global.shape
    assert B == Bp == Bn and D == Dp == Dn
    assert P >= 1 and N >= 1

    # Free, contiguous reshapes (no HBM copies): fold the small P / N axes
    # into the lane axis so every block is a dense (sublane, lane) slab.
    anc2d = anc_global.reshape(B, D)
    pos2d = pos_global.reshape(B, P * D)
    neg2d = neg_global.reshape(B, N * D)

    # Batch tile: biggest multiple of 8 rows fitting ~vmem_target_bytes of
    # raw input per grid step (~2x that double-buffered, plus f32 temporaries,
    # all under the 48 MiB scoped limit below — safe on v7x's 64 MiB VMEM).
    itemsize = max(jnp.dtype(a.dtype).itemsize for a in (anc2d, pos2d, neg2d))
    bytes_per_batch_row = (1 + P + N) * D * itemsize
    if tile_b is None:
        tile_b = (vmem_target_bytes // bytes_per_batch_row) // 8 * 8
    tile_b = int(max(8, min(tile_b, _round_up(B, 8))))
    tile_b = _round_up(tile_b, 8)

    grid_b = pl.cdiv(B, tile_b)

    kernel = functools.partial(
        _triplet_loss_kernel, margin=float(margin), batch=B, tile_b=tile_b,
        num_pos=P, num_neg=N, dim=D)

    partials = pl.pallas_call(
        kernel,
        out_shape=jax.ShapeDtypeStruct((grid_b, 1, 1), jnp.float32),
        grid=(grid_b,),
        in_specs=[
            pl.BlockSpec((tile_b, D), lambda i: (i, 0)),
            pl.BlockSpec((tile_b, P * D), lambda i: (i, 0)),
            pl.BlockSpec((tile_b, N * D), lambda i: (i, 0)),
        ],
        # One partial per grid step -> the batch axis is truly parallel
        # (both TensorCores on v7x); final reduce happens below.
        out_specs=pl.BlockSpec((1, 1, 1), lambda i: (i, 0, 0)),
        compiler_params=pltpu.CompilerParams(
            dimension_semantics=("parallel",),
            vmem_limit_bytes=int(vmem_limit_bytes)),
    )(anc2d, pos2d, neg2d)

    return jnp.sum(partials) / B


# ----------------------------------------------------------------------------
# Module mirroring the PyTorch TripletLoss.
# ----------------------------------------------------------------------------
class TripletLoss:
    def __init__(self, margin: float):
        self.margin = float(margin)

    def forward(self, output_dict):
        # TODO(synk): best_pos_distance also returns min_pos / mean_pos, but the
        # loss only consumes max_pos, so only that path is implemented.
        loss = {}
        loss['loss'] = triplet_loss_pallas(
            output_dict['anc_global'],
            output_dict['pos_global'],
            output_dict['neg_global'],
            self.margin,
        )
        return loss

    __call__ = forward


# Pure-JAX reference (mirrors the PyTorch math) for correctness checking.
def _triplet_loss_ref(anc, pos, neg, margin):
    d_pos = jnp.sum((pos - anc) ** 2, axis=2)                 # (B, P)
    max_pos = jnp.max(d_pos, axis=1)                          # (B,)
    d_neg = jnp.sum((neg - anc) ** 2, axis=2)                 # (B, N)
    tl = jnp.maximum(margin + max_pos[:, None] - d_neg, 0.0)  # (B, N)
    return jnp.mean(jnp.sum(tl, axis=1))


if __name__ == "__main__":
    key = jax.random.PRNGKey(0)
    margin = 0.5
    module = TripletLoss(margin)

    # Case 1: batch=8 (block-aligned), 2 positives, 6 negatives, D=256.
    ka, kp, kn = jax.random.split(key, 3)
    B, P, N, D = 8, 2, 6, 256
    anc = jax.random.normal(ka, (B, 1, D), dtype=jnp.float32)
    pos = jax.random.normal(kp, (B, P, D), dtype=jnp.float32)
    neg = jax.random.normal(kn, (B, N, D), dtype=jnp.float32)
    loss = jax.block_until_ready(
        module({'anc_global': anc, 'pos_global': pos, 'neg_global': neg})['loss'])
    ref = _triplet_loss_ref(anc, pos, neg, margin)
    assert jnp.allclose(loss, ref, rtol=1e-4, atol=1e-4), (loss, ref)

    # Case 2: batch=5 (exercises the out-of-bounds last block + row mask).
    kb, kq, km = jax.random.split(jax.random.PRNGKey(1), 3)
    B2, P2, N2 = 5, 3, 4
    anc2 = jax.random.normal(kb, (B2, 1, D), dtype=jnp.float32)
    pos2 = jax.random.normal(kq, (B2, P2, D), dtype=jnp.float32)
    neg2 = jax.random.normal(km, (B2, N2, D), dtype=jnp.float32)
    loss2 = jax.block_until_ready(
        module({'anc_global': anc2, 'pos_global': pos2, 'neg_global': neg2})['loss'])
    ref2 = _triplet_loss_ref(anc2, pos2, neg2, margin)
    assert jnp.allclose(loss2, ref2, rtol=1e-4, atol=1e-4), (loss2, ref2)

    print("KERNEL_OK")
</pallas_src>

<mosaic_0001>
module attributes {stable_mosaic.version = 11 : i64} {
  func.func @_triplet_loss_kernel(%arg0: i32, %arg1: memref<8x256xf32, #tpu.memory_space<vmem>>, %arg2: memref<8x512xf32, #tpu.memory_space<vmem>>, %arg3: memref<8x1536xf32, #tpu.memory_space<vmem>>, %arg4: memref<1x1x1xf32, #tpu.memory_space<vmem>>) attributes {dimension_semantics = [#tpu.dimension_semantics<parallel>], iteration_bounds = array<i64: 1>, scalar_prefetch = 0 : i64, scratch_operands = 0 : i64, tpu.core_type = #tpu.core_type<tc>, window_params = [{transform_indices = @transform_0, window_bounds = array<i64: 8, 256>}, {transform_indices = @transform_1, window_bounds = array<i64: 8, 512>}, {transform_indices = @transform_2, window_bounds = array<i64: 8, 1536>}, {transform_indices = @transform_3, window_bounds = array<i64: 1, 1, 1>}]} {
    %c0 = arith.constant 0 : index
    %c0_0 = arith.constant 0 : index
    %0 = vector.load %arg1[%c0, %c0_0] : memref<8x256xf32, #tpu.memory_space<vmem>>, vector<8x256xf32>
    %c0_1 = arith.constant 0 : index
    %c0_2 = arith.constant 0 : index
    %1 = vector.load %arg2[%c0_1, %c0_2] : memref<8x512xf32, #tpu.memory_space<vmem>>, vector<8x256xf32>
    %2 = arith.subf %1, %0 : vector<8x256xf32>
    %3 = arith.mulf %2, %2 : vector<8x256xf32>
    %cst = arith.constant dense<0.000000e+00> : vector<8xf32>
    %4 = vector.multi_reduction <add>, %3, %cst [1] : vector<8x256xf32> to vector<8xf32>
    %5 = vector.shape_cast %4 : vector<8xf32> to vector<8x1xf32>
    %c0_3 = arith.constant 0 : index
    %c256 = arith.constant 256 : index
    %6 = vector.load %arg2[%c0_3, %c256] : memref<8x512xf32, #tpu.memory_space<vmem>>, vector<8x256xf32>
    %7 = arith.subf %6, %0 : vector<8x256xf32>
    %8 = arith.mulf %7, %7 : vector<8x256xf32>
    %cst_4 = arith.constant dense<0.000000e+00> : vector<8xf32>
    %9 = vector.multi_reduction <add>, %8, %cst_4 [1] : vector<8x256xf32> to vector<8xf32>
    %10 = vector.shape_cast %9 : vector<8xf32> to vector<8x1xf32>
    %11 = arith.maximumf %5, %10 : vector<8x1xf32>
    %cst_5 = arith.constant 0.000000e+00 : f32
    %12 = vector.broadcast %cst_5 : f32 to vector<8x1xf32>
    %c0_6 = arith.constant 0 : index
    %c0_7 = arith.constant 0 : index
    %13 = vector.load %arg3[%c0_6, %c0_7] : memref<8x1536xf32, #tpu.memory_space<vmem>>, vector<8x256xf32>
    %14 = arith.subf %13, %0 : vector<8x256xf32>
    %15 = arith.mulf %14, %14 : vector<8x256xf32>
    %cst_8 = arith.constant dense<0.000000e+00> : vector<8xf32>
    %16 = vector.multi_reduction <add>, %15, %cst_8 [1] : vector<8x256xf32> to vector<8xf32>
    %17 = vector.shape_cast %16 : vector<8xf32> to vector<8x1xf32>
    %cst_9 = arith.constant 5.000000e-01 : f32
    %18 = vector.broadcast %cst_9 : f32 to vector<8x1xf32>
    %19 = arith.addf %18, %11 : vector<8x1xf32>
    %20 = arith.subf %19, %17 : vector<8x1xf32>
    %cst_10 = arith.constant 0.000000e+00 : f32
    %21 = vector.broadcast %cst_10 : f32 to vector<8x1xf32>
    %22 = arith.maximumf %20, %21 : vector<8x1xf32>
    %23 = arith.addf %12, %22 : vector<8x1xf32>
    %c0_11 = arith.constant 0 : index
    %c256_12 = arith.constant 256 : index
    %24 = vector.load %arg3[%c0_11, %c256_12] : memref<8x1536xf32, #tpu.memory_space<vmem>>, vector<8x256xf32>
    %25 = arith.subf %24, %0 : vector<8x256xf32>
    %26 = arith.mulf %25, %25 : vector<8x256xf32>
    %cst_13 = arith.constant dense<0.000000e+00> : vector<8xf32>
    %27 = vector.multi_reduction <add>, %26, %cst_13 [1] : vector<8x256xf32> to vector<8xf32>
    %28 = vector.shape_cast %27 : vector<8xf32> to vector<8x1xf32>
    %cst_14 = arith.constant 5.000000e-01 : f32
    %29 = vector.broadcast %cst_14 : f32 to vector<8x1xf32>
    %30 = arith.addf %29, %11 : vector<8x1xf32>
    %31 = arith.subf %30, %28 : vector<8x1xf32>
    %cst_15 = arith.constant 0.000000e+00 : f32
    %32 = vector.broadcast %cst_15 : f32 to vector<8x1xf32>
    %33 = arith.maximumf %31, %32 : vector<8x1xf32>
    %34 = arith.addf %23, %33 : vector<8x1xf32>
    %c0_16 = arith.constant 0 : index
    %c512 = arith.constant 512 : index
    %35 = vector.load %arg3[%c0_16, %c512] : memref<8x1536xf32, #tpu.memory_space<vmem>>, vector<8x256xf32>
    %36 = arith.subf %35, %0 : vector<8x256xf32>
    %37 = arith.mulf %36, %36 : vector<8x256xf32>
    %cst_17 = arith.constant dense<0.000000e+00> : vector<8xf32>
    %38 = vector.multi_reduction <add>, %37, %cst_17 [1] : vector<8x256xf32> to vector<8xf32>
    %39 = vector.shape_cast %38 : vector<8xf32> to vector<8x1xf32>
    %cst_18 = arith.constant 5.000000e-01 : f32
    %40 = vector.broadcast %cst_18 : f32 to vector<8x1xf32>
    %41 = arith.addf %40, %11 : vector<8x1xf32>
    %42 = arith.subf %41, %39 : vector<8x1xf32>
    %cst_19 = arith.constant 0.000000e+00 : f32
    %43 = vector.broadcast %cst_19 : f32 to vector<8x1xf32>
    %44 = arith.maximumf %42, %43 : vector<8x1xf32>
    %45 = arith.addf %34, %44 : vector<8x1xf32>
    %c0_20 = arith.constant 0 : index
    %c768 = arith.constant 768 : index
    %46 = vector.load %arg3[%c0_20, %c768] : memref<8x1536xf32, #tpu.memory_space<vmem>>, vector<8x256xf32>
    %47 = arith.subf %46, %0 : vector<8x256xf32>
    %48 = arith.mulf %47, %47 : vector<8x256xf32>
    %cst_21 = arith.constant dense<0.000000e+00> : vector<8xf32>
    %49 = vector.multi_reduction <add>, %48, %cst_21 [1] : vector<8x256xf32> to vector<8xf32>
    %50 = vector.shape_cast %49 : vector<8xf32> to vector<8x1xf32>
    %cst_22 = arith.constant 5.000000e-01 : f32
    %51 = vector.broadcast %cst_22 : f32 to vector<8x1xf32>
    %52 = arith.addf %51, %11 : vector<8x1xf32>
    %53 = arith.subf %52, %50 : vector<8x1xf32>
    %cst_23 = arith.constant 0.000000e+00 : f32
    %54 = vector.broadcast %cst_23 : f32 to vector<8x1xf32>
    %55 = arith.maximumf %53, %54 : vector<8x1xf32>
    %56 = arith.addf %45, %55 : vector<8x1xf32>
    %c0_24 = arith.constant 0 : index
    %c1024 = arith.constant 1024 : index
    %57 = vector.load %arg3[%c0_24, %c1024] : memref<8x1536xf32, #tpu.memory_space<vmem>>, vector<8x256xf32>
    %58 = arith.subf %57, %0 : vector<8x256xf32>
    %59 = arith.mulf %58, %58 : vector<8x256xf32>
    %cst_25 = arith.constant dense<0.000000e+00> : vector<8xf32>
    %60 = vector.multi_reduction <add>, %59, %cst_25 [1] : vector<8x256xf32> to vector<8xf32>
    %61 = vector.shape_cast %60 : vector<8xf32> to vector<8x1xf32>
    %cst_26 = arith.constant 5.000000e-01 : f32
    %62 = vector.broadcast %cst_26 : f32 to vector<8x1xf32>
    %63 = arith.addf %62, %11 : vector<8x1xf32>
    %64 = arith.subf %63, %61 : vector<8x1xf32>
    %cst_27 = arith.constant 0.000000e+00 : f32
    %65 = vector.broadcast %cst_27 : f32 to vector<8x1xf32>
    %66 = arith.maximumf %64, %65 : vector<8x1xf32>
    %67 = arith.addf %56, %66 : vector<8x1xf32>
    %c0_28 = arith.constant 0 : index
    %c1280 = arith.constant 1280 : index
    %68 = vector.load %arg3[%c0_28, %c1280] : memref<8x1536xf32, #tpu.memory_space<vmem>>, vector<8x256xf32>
    %69 = arith.subf %68, %0 : vector<8x256xf32>
    %70 = arith.mulf %69, %69 : vector<8x256xf32>
    %cst_29 = arith.constant dense<0.000000e+00> : vector<8xf32>
    %71 = vector.multi_reduction <add>, %70, %cst_29 [1] : vector<8x256xf32> to vector<8xf32>
    %72 = vector.shape_cast %71 : vector<8xf32> to vector<8x1xf32>
    %cst_30 = arith.constant 5.000000e-01 : f32
    %73 = vector.broadcast %cst_30 : f32 to vector<8x1xf32>
    %74 = arith.addf %73, %11 : vector<8x1xf32>
    %75 = arith.subf %74, %72 : vector<8x1xf32>
    %cst_31 = arith.constant 0.000000e+00 : f32
    %76 = vector.broadcast %cst_31 : f32 to vector<8x1xf32>
    %77 = arith.maximumf %75, %76 : vector<8x1xf32>
    %78 = arith.addf %67, %77 : vector<8x1xf32>
    %c8_i32 = arith.constant 8 : i32
    %79 = arith.muli %arg0, %c8_i32 : i32
    %80 = tpu.iota {dimensions = array<i32: 0>} : vector<8x1xi32>
    %81 = vector.broadcast %79 : i32 to vector<8x1xi32>
    %82 = arith.addi %81, %80 : vector<8x1xi32>
    %c8_i32_32 = arith.constant 8 : i32
    %83 = vector.broadcast %c8_i32_32 : i32 to vector<8x1xi32>
    %84 = arith.cmpi slt, %82, %83 : vector<8x1xi32>
    %cst_33 = arith.constant 0.000000e+00 : f32
    %85 = vector.broadcast %cst_33 : f32 to vector<8x1xf32>
    %86 = arith.select %84, %78, %85 : vector<8x1xi1>, vector<8x1xf32>
    %87 = vector.shape_cast %86 : vector<8x1xf32> to vector<1x8x1xf32>
    %cst_34 = arith.constant dense<0.000000e+00> : vector<1xf32>
    %88 = vector.multi_reduction <add>, %87, %cst_34 [1, 2] : vector<1x8x1xf32> to vector<1xf32>
    %89 = vector.shape_cast %88 : vector<1xf32> to vector<1x1x1xf32>
    %90 = vector.extract %89[0, 0, 0] : f32 from vector<1x1x1xf32>
    %91 = vector.broadcast %90 : f32 to vector<1x1xf32>
    %92 = vector.shape_cast %91 : vector<1x1xf32> to vector<1x1x1xf32>
    %c0_35 = arith.constant 0 : index
    %c0_36 = arith.constant 0 : index
    %c0_37 = arith.constant 0 : index
    %93 = vector.load %arg4[%c0_35, %c0_36, %c0_37] : memref<1x1x1xf32, #tpu.memory_space<vmem>>, vector<1x1x1xf32>
    tpu.vector_store %arg4[%c0_35, %c0_36, %c0_37], %92 {strides = array<i32>} : memref<1x1x1xf32, #tpu.memory_space<vmem>>, vector<1x1x1xf32>,
    return
  }
  func.func @transform_0(%arg0: i32) -> (i32, i32) {
    %c0_i32 = arith.constant 0 : i32
    %c0_i32_0 = arith.constant 0 : i32
    return %arg0, %c0_i32 : i32, i32
  }
  func.func @transform_1(%arg0: i32) -> (i32, i32) {
    %c0_i32 = arith.constant 0 : i32
    %c0_i32_0 = arith.constant 0 : i32
    return %arg0, %c0_i32 : i32, i32
  }
  func.func @transform_2(%arg0: i32) -> (i32, i32) {
    %c0_i32 = arith.constant 0 : i32
    %c0_i32_0 = arith.constant 0 : i32
    return %arg0, %c0_i32 : i32, i32
  }
  func.func @transform_3(%arg0: i32) -> (i32, i32, i32) {
    %c0_i32 = arith.constant 0 : i32
    %c0_i32_0 = arith.constant 0 : i32
    %c0_i32_1 = arith.constant 0 : i32
    return %arg0, %c0_i32, %c0_i32_0 : i32, i32, i32
  }
}

</mosaic_0001>

<llo_original>
// kernel: tpu_custom_call.1
$region0: #{tpu_custom_call.1}
  #allocation0 [shape = 'u32[]', space=smem, size = 0x4, offset = 0x4, fixed_abs, tag = 'smem constant byte address 0x4 - core index']
  #allocation1 [shape = 'u32[144,128]{1,0:T(1,128)}', space=vmem, size = 0x12000, scoped, tag = 'internal scratch']
  %s0 = inlined_call_operand.hbm [shape: f32[8,256], index: 0, kind: input, shape index: {}]
  %s1 = inlined_call_operand.hbm [shape: f32[8,512], index: 1, kind: input, shape index: {}]
  %s2 = inlined_call_operand.hbm [shape: f32[8,1536], index: 2, kind: input, shape index: {}]
  %s3 = inlined_call_operand.hbm [shape: f32[1,1,1], index: 3, kind: output, shape index: {}]
  %s4 = sld [smem:[#allocation0]]
  $region34: #{tpu_custom_call.1} parent=0
    _
  %s6 = ssub.s32 1, %s4
  %s7 = scalar_select 0, %s6, %s4
  $region1: #{tpu_custom_call.1} parent=0
    #allocation2 [shape = 'u8[8192]{0}', space=vmem, size = 0x2000, scoped, tag = 'input window, operand 0, single buffered']
    #allocation3 [shape = 's32[1]{0}', space=sflag, size = 0x4, scoped, tag = 'scoped memory for tpu_custom_call.1']
    #allocation4 [shape = 's32[1]{0}', space=sflag, size = 0x4, scoped, tag = 'scoped memory for tpu_custom_call.1']
    #allocation5 [shape = 'u8[16384]{0}', space=vmem, size = 0x4000, scoped, tag = 'input window, operand 1, single buffered']
    #allocation6 [shape = 's32[1]{0}', space=sflag, size = 0x4, scoped, tag = 'scoped memory for tpu_custom_call.1']
    #allocation7 [shape = 'u8[49152]{0}', space=vmem, size = 0xc000, scoped, tag = 'input window, operand 2, single buffered']
    #allocation8 [shape = 'u8[512]{0}', space=vmem, size = 0x400, scoped, tag = 'output window, operand 0, single buffered']
    %8 = vsyncpa [#allocation3], 0
    %9 = vsyncpa [#allocation6], 0
    %10 = vsyncpa [#allocation4], 0
    // Predicated region
    $region2: #{tpu_custom_call.1} parent=1 // pred_check
      _
    $region3: #{tpu_custom_call.1} parent=1 // pred_check_branch
      %12 = sbr.rel (0) target = $region5
    $region4: #{tpu_custom_call.1} parent=1 // pred_region
      %s14 = ssub.s32 256, 256
      %15 = vsyncadd [#allocation3], %s14
      %s17 = sshll.u32 [#allocation2], 4
      %s18 = int_to_ptr.vmem [resolvable:$true] %s17
      %20 = dma.hbm_to_vmem [thread:$0]  %s0, 256, %s18, [#allocation3]
    $region5: #{tpu_custom_call.1} parent=1 // pred_fallthru
      _
    // Predicated region
    $region6: #{tpu_custom_call.1} parent=1 // pred_check
      _
    $region7: #{tpu_custom_call.1} parent=1 // pred_check_branch
      %22 = sbr.rel (0) target = $region9
    $region8: #{tpu_custom_call.1} parent=1 // pred_region
      %s24 = ssub.s32 512, 512
      %25 = vsyncadd [#allocation6], %s24
      %s27 = sshll.u32 [#allocation5], 4
      %s28 = int_to_ptr.vmem [resolvable:$true] %s27
      %30 = dma.hbm_to_vmem [thread:$0]  %s1, 512, %s28, [#allocation6]
    $region9: #{tpu_custom_call.1} parent=1 // pred_fallthru
      _
    // Predicated region
    $region10: #{tpu_custom_call.1} parent=1 // pred_check
      _
    $region11: #{tpu_custom_call.1} parent=1 // pred_check_branch
      %32 = sbr.rel (0) target = $region13
    $region12: #{tpu_custom_call.1} parent=1 // pred_region
      %s34 = ssub.s32 1536, 1536
      %35 = vsyncadd [#allocation6], %s34
      %s37 = sshll.u32 [#allocation7], 4
      %s38 = int_to_ptr.vmem [resolvable:$true] %s37
      %40 = dma.hbm_to_vmem [thread:$0]  %s2, 1536, %s38, [#allocation6]
    $region13: #{tpu_custom_call.1} parent=1 // pred_fallthru
      _
    // Predicated region
    $region14: #{tpu_custom_call.1} parent=1 // pred_check
      _
    $region15: #{tpu_custom_call.1} parent=1 // pred_check_branch
      %42 = sbr.rel (0) target = $region17
    $region16: #{tpu_custom_call.1} parent=1 // pred_region
      %43 = dma.done [#allocation3], 256
    $region17: #{tpu_custom_call.1} parent=1 // pred_fallthru
      _
    // Predicated region
    $region18: #{tpu_custom_call.1} parent=1 // pred_check
      _
    $region19: #{tpu_custom_call.1} parent=1 // pred_check_branch
      %45 = sbr.rel (0) target = $region21
    $region20: #{tpu_custom_call.1} parent=1 // pred_region
      %46 = dma.done [#allocation6], 512
    $region21: #{tpu_custom_call.1} parent=1 // pred_fallthru
      _
    // Predicated region
    $region22: #{tpu_custom_call.1} parent=1 // pred_check
      _
    $region23: #{tpu_custom_call.1} parent=1 // pred_check_branch
      %48 = sbr.rel (0) target = $region25
    $region24: #{tpu_custom_call.1} parent=1 // pred_region
      %49 = dma.done [#allocation6], 1536
    $region25: #{tpu_custom_call.1} parent=1 // pred_fallthru
      _
    %v50 = vld [vmem:[#allocation2] sm:$0xff]
    %v51 = vld [vmem:[#allocation2 + $0x8] sm:$0xff]
    %v52 = vld [vmem:[#allocation5] sm:$0xff]
    %v53 = vld [vmem:[#allocation5 + $0x8] sm:$0xff]
    %v54 = vsub.f32 %v52, %v50
    %v55 = vsub.f32 %v53, %v51
    %v56 = vmul.f32 %v54, %v54
    %v57 = vmul.f32 %v55, %v55
    %v58 = vadd.f32 %v56, %v57
    %59 = vadd.xlane.f32.xlu0 %v58
    %v60 = vpop.xlane.xlu0 %59
    %v61 = vld [vmem:[#allocation5 + $0x10] sm:$0xff]
    %v62 = vld [vmem:[#allocation5 + $0x18] sm:$0xff]
    %v63 = vsub.f32 %v61, %v50
    %v64 = vsub.f32 %v62, %v51
    %v65 = vmul.f32 %v63, %v63
    %v66 = vmul.f32 %v64, %v64
    %v67 = vadd.f32 %v65, %v66
    %68 = vadd.xlane.f32.xlu0 %v67
    %v69 = vpop.xlane.xlu0 %68
    %v70 = vmax.f32 %v60, %v69
    %v71 = vld [vmem:[#allocation7] sm:$0xff]
    %v72 = vld [vmem:[#allocation7 + $0x8] sm:$0xff]
    %v73 = vsub.f32 %v71, %v50
    %v74 = vsub.f32 %v72, %v51
    %v75 = vmul.f32 %v73, %v73
    %v76 = vmul.f32 %v74, %v74
    %v77 = vadd.f32 %v75, %v76
    %78 = vadd.xlane.f32.xlu0 %v77
    %v79 = vpop.xlane.xlu0 %78
    %v80 = vadd.f32 %v70, 0.5
    %v81 = vsub.f32 %v80, %v79
    %v82 = vmax.f32 %v81, 0.0
    %v83 = vadd.f32 %v82, 0.0
    %v84 = vld [vmem:[#allocation7 + $0x10] sm:$0xff]
    %v85 = vld [vmem:[#allocation7 + $0x18] sm:$0xff]
    %v86 = vsub.f32 %v84, %v50
    %v87 = vsub.f32 %v85, %v51
    %v88 = vmul.f32 %v86, %v86
    %v89 = vmul.f32 %v87, %v87
    %v90 = vadd.f32 %v88, %v89
    %91 = vadd.xlane.f32.xlu0 %v90
    %v92 = vpop.xlane.xlu0 %91
    %v93 = vsub.f32 %v80, %v92
    %v94 = vmax.f32 %v93, 0.0
    %v95 = vadd.f32 %v83, %v94
    %v96 = vld [vmem:[#allocation7 + $0x20] sm:$0xff]
    %v97 = vld [vmem:[#allocation7 + $0x28] sm:$0xff]
    %v98 = vsub.f32 %v96, %v50
    %v99 = vsub.f32 %v97, %v51
    %v100 = vmul.f32 %v98, %v98
    %v101 = vmul.f32 %v99, %v99
    %v102 = vadd.f32 %v100, %v101
    %103 = vadd.xlane.f32.xlu0 %v102
    %v104 = vpop.xlane.xlu0 %103
    %v105 = vsub.f32 %v80, %v104
    %v106 = vmax.f32 %v105, 0.0
    %v107 = vadd.f32 %v95, %v106
    %v108 = vld [vmem:[#allocation7 + $0x30] sm:$0xff]
    %v109 = vld [vmem:[#allocation7 + $0x38] sm:$0xff]
    %v110 = vsub.f32 %v108, %v50
    %v111 = vsub.f32 %v109, %v51
    %v112 = vmul.f32 %v110, %v110
    %v113 = vmul.f32 %v111, %v111
    %v114 = vadd.f32 %v112, %v113
    %115 = vadd.xlane.f32.xlu0 %v114
    %v116 = vpop.xlane.xlu0 %115
    %v117 = vsub.f32 %v80, %v116
    %v118 = vmax.f32 %v117, 0.0
    %v119 = vadd.f32 %v107, %v118
    %v120 = vld [vmem:[#allocation7 + $0x40] sm:$0xff]
    %v121 = vld [vmem:[#allocation7 + $0x48] sm:$0xff]
    %v122 = vsub.f32 %v120, %v50
    %v123 = vsub.f32 %v121, %v51
    %v124 = vmul.f32 %v122, %v122
    %v125 = vmul.f32 %v123, %v123
    %v126 = vadd.f32 %v124, %v125
    %127 = vadd.xlane.f32.xlu0 %v126
    %v128 = vpop.xlane.xlu0 %127
    %v129 = vsub.f32 %v80, %v128
    %v130 = vmax.f32 %v129, 0.0
    %v131 = vadd.f32 %v119, %v130
    %v132 = vld [vmem:[#allocation7 + $0x50] sm:$0xff]
    %v133 = vld [vmem:[#allocation7 + $0x58] sm:$0xff]
    %v134 = vsub.f32 %v132, %v50
    %v135 = vsub.f32 %v133, %v51
    %v136 = vmul.f32 %v134, %v134
    %v137 = vmul.f32 %v135, %v135
    %v138 = vadd.f32 %v136, %v137
    %139 = vadd.xlane.f32.xlu0 %v138
    %v140 = vpop.xlane.xlu0 %139
    %v141 = vsub.f32 %v80, %v140
    %v142 = vmax.f32 %v141, 0.0
    %v143 = vadd.f32 %v131, %v142
    %s144 = smul.u32 0, 8
    %v145 = vlaneseq
    %v146 = vshrl.u32 %v145, 7
    %v147 = vstv %s144
    %v148 = vadd.s32 %v147, %v146
    %vm149 = vcmp.lt.s32.totalorder %v148, 8
    %v150 = vsel %vm149, %v143, 0.0
    %vm151 = vcmask 7168
    %v152 = vsel %vm151, %v150, 0.0
    %153 = vadd.xlane.f32.xlu0 %v152
    %v154 = vpop.xlane.xlu0 %153
    %v155 = vrot.slane %v154, 4
    %v156 = vadd.f32 %v154, %v155
    %v157 = vrot.slane %v156, 2
    %v158 = vadd.f32 %v156, %v157
    %v159 = vrot.slane %v158, 1
    %v160 = vadd.f32 %v158, %v159
    %s161 = vtos %v160
    %v162 = vstv %s161
    %vm163 = vcmask 0
    %164 = vst.msk [vmem:[#allocation8] sm:$0x1] %vm163, %v162
    // Predicated region
    $region26: #{tpu_custom_call.1} parent=1 // pred_check
      _
    $region27: #{tpu_custom_call.1} parent=1 // pred_check_branch
      %166 = sbr.rel (0) target = $region29
    $region28: #{tpu_custom_call.1} parent=1 // pred_region
      %s168 = ssub.s32 16, 16
      %169 = vsyncadd [#allocation4], %s168
      %s171 = sshll.u32 [#allocation8], 4
      %s172 = int_to_ptr.vmem [resolvable:$true] %s171
      %174 = dma.vmem_to_hbm [thread:$0]  %s172, 16, %s3, [#allocation4]
    $region29: #{tpu_custom_call.1} parent=1 // pred_fallthru
      _
    // Predicated region
    $region30: #{tpu_custom_call.1} parent=1 // pred_check
      _
    $region31: #{tpu_custom_call.1} parent=1 // pred_check_branch
      %176 = sbr.rel (0) target = $region33
    $region32: #{tpu_custom_call.1} parent=1 // pred_region
      %177 = dma.done [#allocation4], 16
    $region33: #{tpu_custom_call.1} parent=1 // pred_fallthru
      _
    %178 = vsyncpa [#allocation3], 1
    %179 = vsyncpa [#allocation6], 1
    %180 = vsyncpa [#allocation4], 1

</llo_original>
